<compile_context>
chip_gen: v6e
topology: v6e:2x2x1
jax: 0.10.0
libtpu: 0.0.40
codegen_flags: <defaults>
</compile_context>

<pallas_src>
import math

import jax
import jax.numpy as jnp
from jax.experimental import pallas as pl
from jax.experimental.pallas import tpu as pltpu

LN_EPS = 1e-5


def _round_up(x, m):
    return ((x + m - 1) // m) * m


def _proj_ln_kernel(p_ref, w_ref, pv_ref, o_ref):
    # p_ref : (TILE_M, K) bf16 patch rows (double-buffered by the pipeline)
    # w_ref : (K, E)      bf16 projection weight     (VMEM-resident)
    # pv_ref: (3, E)      f32 [conv bias; LN gamma; LN beta] (VMEM-resident)
    # o_ref : (TILE_M, E) output in x.dtype
    y = jnp.dot(p_ref[...], w_ref[...], preferred_element_type=jnp.float32)
    pv = pv_ref[...]
    y = y + pv[0:1, :]                                   # conv bias
    # Two-pass LayerNorm statistics over the true embed dim (no padding), f32.
    mean = jnp.mean(y, axis=-1, keepdims=True)
    d = y - mean
    var = jnp.mean(d * d, axis=-1, keepdims=True)
    yhat = d * jax.lax.rsqrt(var + LN_EPS)
    o_ref[...] = (yhat * pv[1:2, :] + pv[2:3, :]).astype(o_ref.dtype)


def _pick_tile_m(M, K, E, out_itemsize, tile_m, vmem_budget=12 * 1024 * 1024):
    """Row-tile size: as big as the VMEM budget allows, megacore-friendly."""
    resident = K * E * 2 + 3 * E * 4                           # weight + param block
    per_row = 2 * K * 2 + 2 * E * out_itemsize + 3 * E * 4     # dbuf in/out + f32 temps
    cap = max(8, (vmem_budget - resident) // max(per_row, 1))
    tm = min(tile_m, cap)
    if M > 8:                                  # >=2 grid steps when M allows (v7x: 2 TCs)
        tm = min(tm, _round_up(pl.cdiv(M, 2), 8))
    tm = min(tm, _round_up(M, 8))
    tm = max(8, (tm // 8) * 8)                 # sublane-aligned
    return tm


def overlap_patch_embedding(x, conv_w, conv_b, ln_g, ln_b, *, patch_size, stride,
                            tile_m=1024):
    """x: (B, C, H, W) NCHW.  conv_w: (E, C, ks, ks) PyTorch OIHW layout.

    Returns (y, Ho, Wo) with y of shape (B, Ho*Wo, E), matching
    `norm(proj(x).flatten(2).transpose(1, 2))` of the PyTorch module.
    """
    B, C, H, W = x.shape
    E = conv_w.shape[0]
    ks = patch_size
    pad = patch_size // 2
    Ho = (H + 2 * pad - ks) // stride + 1
    Wo = (W + 2 * pad - ks) // stride + 1
    K = C * ks * ks
    M = B * Ho * Wo
    out_dtype = x.dtype
    out_itemsize = jnp.dtype(out_dtype).itemsize

    # im2col as ONE fused XLA op, channels-last, already bf16 (half the bytes of
    # the only large intermediate; MXU input dtype).  Feature order is
    # (C, kh, kw), matching the OIHW -> (K, E) weight reshape below.
    patches = jax.lax.conv_general_dilated_patches(
        x.astype(jnp.bfloat16), filter_shape=(ks, ks),
        window_strides=(stride, stride),
        padding=((pad, pad), (pad, pad)),
        dimension_numbers=("NCHW", "OIHW", "NHWC"))            # (B, Ho, Wo, K)
    patches = patches.reshape(M, K)                            # free reshape

    w2d = conv_w.transpose(1, 2, 3, 0).reshape(K, E).astype(jnp.bfloat16)
    # conv bias / LN gamma / LN beta packed into one small resident block.
    pvec = jnp.stack([conv_b.astype(jnp.float32),
                      ln_g.astype(jnp.float32),
                      ln_b.astype(jnp.float32)], axis=0)       # (3, E)

    TILE_M = _pick_tile_m(M, K, E, out_itemsize, tile_m)
    grid_m = pl.cdiv(M, TILE_M)

    out = pl.pallas_call(
        _proj_ln_kernel,
        out_shape=jax.ShapeDtypeStruct((M, E), out_dtype),
        grid=(grid_m,),
        in_specs=[
            pl.BlockSpec((TILE_M, K), lambda i: (i, 0)),       # row-tiled patches
            pl.BlockSpec((K, E), lambda i: (0, 0)),            # resident weight
            pl.BlockSpec((3, E), lambda i: (0, 0)),            # resident bias/gamma/beta
        ],
        out_specs=pl.BlockSpec((TILE_M, E), lambda i: (i, 0)),
        compiler_params=pltpu.CompilerParams(
            dimension_semantics=("parallel",),                 # megacore-shardable on v7x
            vmem_limit_bytes=32 * 1024 * 1024),
        cost_estimate=pl.CostEstimate(
            flops=2 * M * K * E,
            transcendentals=M,
            bytes_accessed=M * K * 2 + K * E * 2 + M * E * out_itemsize),
    )(patches, w2d, pvec)

    return out.reshape(B, Ho * Wo, E), Ho, Wo


def _reference(x, conv_w, conv_b, ln_g, ln_b, *, patch_size, stride):
    pad = patch_size // 2
    y = jax.lax.conv_general_dilated(
        x, conv_w, window_strides=(stride, stride),
        padding=((pad, pad), (pad, pad)),
        dimension_numbers=("NCHW", "OIHW", "NCHW"),
        precision=jax.lax.Precision.HIGHEST)
    y = y + conv_b.reshape(1, -1, 1, 1)
    B, E, Ho, Wo = y.shape
    y = y.reshape(B, E, Ho * Wo).transpose(0, 2, 1)
    mean = jnp.mean(y, axis=-1, keepdims=True)
    var = jnp.mean((y - mean) ** 2, axis=-1, keepdims=True)
    return (y - mean) / jnp.sqrt(var + LN_EPS) * ln_g + ln_b, Ho, Wo


if __name__ == "__main__":
    # Small shapes consistent with the module: B=2, in_chans=4, img=16,
    # patch_size=7, stride=4, embed_dim=32  ->  Ho = Wo = 4, seq = 16.
    B, C, IMG = 2, 4, 16
    PATCH, STRIDE, EMBED = 7, 4, 32

    key = jax.random.PRNGKey(0)
    kx, kw = jax.random.split(key)

    x = jax.random.normal(kx, (B, C, IMG, IMG), dtype=jnp.float32)

    # Deterministic parameter init mirroring the module's _init_weights:
    fan_out = PATCH * PATCH * EMBED
    conv_w = jax.random.normal(kw, (EMBED, C, PATCH, PATCH), dtype=jnp.float32) \
        * math.sqrt(2.0 / fan_out)
    conv_b = jnp.zeros((EMBED,), dtype=jnp.float32)
    ln_g = jnp.ones((EMBED,), dtype=jnp.float32)
    ln_b = jnp.zeros((EMBED,), dtype=jnp.float32)

    y, H, W = overlap_patch_embedding(
        x, conv_w, conv_b, ln_g, ln_b, patch_size=PATCH, stride=STRIDE)
    y = jax.block_until_ready(y)

    y_ref, H_ref, W_ref = _reference(
        x, conv_w, conv_b, ln_g, ln_b, patch_size=PATCH, stride=STRIDE)

    assert (H, W) == (H_ref, W_ref)
    assert y.shape == (B, H * W, EMBED)
    assert y.dtype == x.dtype
    # bf16 MXU operands vs f32 reference -> relaxed tolerance (LN renormalization
    # keeps the relative error at the ~1e-2 level).
    err = jnp.max(jnp.abs(y - y_ref))
    assert jnp.allclose(y, y_ref, atol=5e-2, rtol=5e-2), f"max abs err = {err}"

    print("KERNEL_OK")
</pallas_src>

<mosaic_0001>
module attributes {stable_mosaic.version = 11 : i64} {
  func.func @_proj_ln_kernel(%arg0: i32, %arg1: memref<16x196xbf16, #tpu.memory_space<vmem>>, %arg2: memref<196x32xbf16, #tpu.memory_space<vmem>>, %arg3: memref<3x32xf32, #tpu.memory_space<vmem>>, %arg4: memref<16x32xf32, #tpu.memory_space<vmem>>) attributes {dimension_semantics = [#tpu.dimension_semantics<parallel>], iteration_bounds = array<i64: 2>, scalar_prefetch = 0 : i64, scratch_operands = 0 : i64, tpu.core_type = #tpu.core_type<tc>, window_params = [{transform_indices = @transform_0, window_bounds = array<i64: 16, 196>}, {pipeline_mode = #tpu.pipeline_mode<synchronous>, transform_indices = @transform_1, window_bounds = array<i64: 196, 32>}, {pipeline_mode = #tpu.pipeline_mode<synchronous>, transform_indices = @transform_2, window_bounds = array<i64: 3, 32>}, {transform_indices = @transform_3, window_bounds = array<i64: 16, 32>}]} {
    %c0 = arith.constant 0 : index
    %c0_0 = arith.constant 0 : index
    %0 = vector.load %arg1[%c0, %c0_0] : memref<16x196xbf16, #tpu.memory_space<vmem>>, vector<16x196xbf16>
    %c0_1 = arith.constant 0 : index
    %c0_2 = arith.constant 0 : index
    %1 = vector.load %arg2[%c0_1, %c0_2] : memref<196x32xbf16, #tpu.memory_space<vmem>>, vector<196x32xbf16>
    %cst = arith.constant dense<0.000000e+00> : vector<16x32xf32>
    %2 = tpu.matmul %0, %1, %cst {dimension_numbers = #tpu.dot_dimension_numbers<[1], [0], [0], [1], [0, 0, 1, 1], [], []>} : vector<16x196xbf16>, vector<196x32xbf16>, vector<16x32xf32> -> vector<16x32xf32>
    %c0_3 = arith.constant 0 : index
    %c0_4 = arith.constant 0 : index
    %3 = vector.load %arg3[%c0_3, %c0_4] : memref<3x32xf32, #tpu.memory_space<vmem>>, vector<3x32xf32>
    %4 = vector.extract_strided_slice %3 {offsets = [0, 0], sizes = [1, 32], strides = [1, 1]} : vector<3x32xf32> to vector<1x32xf32>
    %5 = vector.broadcast %4 : vector<1x32xf32> to vector<16x32xf32>
    %6 = arith.addf %2, %5 : vector<16x32xf32>
    %cst_5 = arith.constant dense<0.000000e+00> : vector<16xf32>
    %7 = vector.multi_reduction <add>, %6, %cst_5 [1] : vector<16x32xf32> to vector<16xf32>
    %8 = vector.shape_cast %7 : vector<16xf32> to vector<16x1xf32>
    %cst_6 = arith.constant 3.200000e+01 : f32
    %9 = vector.broadcast %cst_6 : f32 to vector<16x1xf32>
    %10 = arith.divf %8, %9 : vector<16x1xf32>
    %11 = vector.broadcast %10 : vector<16x1xf32> to vector<16x32xf32>
    %12 = arith.subf %6, %11 : vector<16x32xf32>
    %13 = arith.mulf %12, %12 : vector<16x32xf32>
    %cst_7 = arith.constant dense<0.000000e+00> : vector<16xf32>
    %14 = vector.multi_reduction <add>, %13, %cst_7 [1] : vector<16x32xf32> to vector<16xf32>
    %15 = vector.shape_cast %14 : vector<16xf32> to vector<16x1xf32>
    %cst_8 = arith.constant 3.200000e+01 : f32
    %16 = vector.broadcast %cst_8 : f32 to vector<16x1xf32>
    %17 = arith.divf %15, %16 : vector<16x1xf32>
    %cst_9 = arith.constant 9.99999974E-6 : f32
    %18 = vector.broadcast %cst_9 : f32 to vector<16x1xf32>
    %19 = arith.addf %17, %18 : vector<16x1xf32>
    %20 = math.rsqrt %19 : vector<16x1xf32>
    %21 = vector.broadcast %20 : vector<16x1xf32> to vector<16x32xf32>
    %22 = arith.mulf %12, %21 : vector<16x32xf32>
    %23 = vector.extract_strided_slice %3 {offsets = [1, 0], sizes = [1, 32], strides = [1, 1]} : vector<3x32xf32> to vector<1x32xf32>
    %24 = vector.broadcast %23 : vector<1x32xf32> to vector<16x32xf32>
    %25 = arith.mulf %22, %24 : vector<16x32xf32>
    %26 = vector.extract_strided_slice %3 {offsets = [2, 0], sizes = [1, 32], strides = [1, 1]} : vector<3x32xf32> to vector<1x32xf32>
    %27 = vector.broadcast %26 : vector<1x32xf32> to vector<16x32xf32>
    %28 = arith.addf %25, %27 : vector<16x32xf32>
    %c0_10 = arith.constant 0 : index
    %c0_11 = arith.constant 0 : index
    %29 = vector.load %arg4[%c0_10, %c0_11] : memref<16x32xf32, #tpu.memory_space<vmem>>, vector<16x32xf32>
    tpu.vector_store %arg4[%c0_10, %c0_11], %28 {strides = array<i32>} : memref<16x32xf32, #tpu.memory_space<vmem>>, vector<16x32xf32>,
    return
  }
  func.func @transform_0(%arg0: i32) -> (i32, i32) {
    %c0_i32 = arith.constant 0 : i32
    %c0_i32_0 = arith.constant 0 : i32
    return %arg0, %c0_i32 : i32, i32
  }
  func.func @transform_1(%arg0: i32) -> (i32, i32) {
    %c0_i32 = arith.constant 0 : i32
    %c0_i32_0 = arith.constant 0 : i32
    %c0_i32_1 = arith.constant 0 : i32
    return %c0_i32, %c0_i32_0 : i32, i32
  }
  func.func @transform_2(%arg0: i32) -> (i32, i32) {
    %c0_i32 = arith.constant 0 : i32
    %c0_i32_0 = arith.constant 0 : i32
    %c0_i32_1 = arith.constant 0 : i32
    return %c0_i32, %c0_i32_0 : i32, i32
  }
  func.func @transform_3(%arg0: i32) -> (i32, i32) {
    %c0_i32 = arith.constant 0 : i32
    %c0_i32_0 = arith.constant 0 : i32
    return %arg0, %c0_i32 : i32, i32
  }
}

</mosaic_0001>

<llo_original>
// kernel: tpu_custom_call.1
$region0: #{tpu_custom_call.1}
  #allocation0 [shape = 'u32[]', space=smem, size = 0x4, offset = 0x4, fixed_abs, tag = 'smem constant byte address 0x4 - core index']
  #allocation1 [shape = 'u32[144,128]{1,0:T(1,128)}', space=vmem, size = 0x12000, scoped, tag = 'internal scratch']
  %s0 = inlined_call_operand.vmem [shape: bf16[32,196], index: 0, kind: input, shape index: {}]
  %s1 = inlined_call_operand.vmem [shape: bf16[196,32], index: 1, kind: input, shape index: {}]
  %s2 = inlined_call_operand.vmem [shape: f32[3,32], index: 2, kind: input, shape index: {}]
  %s3 = inlined_call_operand.hbm [shape: f32[32,32], index: 3, kind: output, shape index: {}]
  %s4 = sld [smem:[#allocation0]]
  $region45: #{tpu_custom_call.1} parent=0
    _
  %s6 = ssub.s32 1, %s4
  %s7 = scalar_select 0, %s6, %s4
  $region1: #{tpu_custom_call.1} parent=0
    #allocation2 [shape = 'u8[16384]{0}', space=vmem, size = 0x4000, scoped, tag = 'output window, operand 0']
    #allocation3 [shape = 's32[2]{0}', space=sflag, size = 0x8, scoped, tag = 'scoped memory for tpu_custom_call.1']
    %8 = vsyncpa [#allocation3], 0
    %s9 = scalar_lea.sflag [#allocation3], 1
    %10 = vsyncpa %s9, 0
    loop: start=0, step=1, limit=4
    $region2: #{tpu_custom_call.1} parent=1 // loop_pre_header
      _
    $region3: #{tpu_custom_call.1} parent=1 // loop_header
      %s12 = sphi 0, %s16
      %p13 = scmp.ge.s32.totalorder %s12, 4
      %s22 = sphi 0, %s24
      %s25 = sphi 0, %s22
      %s26 = sphi 0, %s25
      %s42 = sphi 0, %s26
      %s46 = sphi 0, %s46
      %s48 = sphi 0, %s46
      %s49 = sphi 0, %s48
      %s63 = sphi 0, %s49
      %s67 = sphi 0, %s67
      %s69 = sphi 0, %s67
      %s70 = sphi 0, %s69
      %s84 = sphi 0, %s70
      %s90 = sphi 0, %s92
      %s93 = sphi 0, %s90
      %s94 = sphi 0, %s93
      %s110 = sphi 0, %s94
    $region4: #{tpu_custom_call.1} parent=1 // loop_header_branch
      %15 = sbr.rel (%p13) target = $region8
    $region5: #{tpu_custom_call.1} parent=1 // loop_body
      %s17 = ssub.s32 %s12, 1
      %s18 = ssub.s32 %s12, 2
      %s19 = sadd.s32 %s12, 1
      %s20 = ssub.s32 %s12, %s19
      %p21 = scmp.eq.s32.totalorder %s20, 0
      %s23 = sadd.s32 %s22, 1
      %s24 = scalar_select %p21, %s22, %s23
      %p27 = pneg %p21
      %p28 = scmp.eq.s32.totalorder %s12, 1
      %p29 = por %p27, %p28
      %p30 = scmp.ne.s32.totalorder %s22, %s25
      %p31 = scmp.eq.s32.totalorder %s12, 0
      %p32 = por %p30, %p31
      %p33 = scmp.ne.s32.totalorder %s22, %s25
      %p34 = scmp.eq.s32.totalorder %s17, 1
      %p35 = por %p33, %p34
      %p36 = scmp.ne.s32.totalorder %s25, %s26
      %p37 = scmp.eq.s32.totalorder %s17, 0
      %p38 = por %p36, %p37
      %p39 = scmp.ne.s32.totalorder %s25, %s26
      %p40 = scmp.eq.s32.totalorder %s18, 1
      %p41 = por %p39, %p40
      %p43 = scmp.ne.s32.totalorder %s26, %s42
      %p44 = scmp.eq.s32.totalorder %s18, 0
      %p45 = por %p43, %p44
      %s47 = sadd.s32 %s46, 1
      %p50 = scmp.eq.s32.totalorder %s12, 1
      %p51 = scmp.ne.s32.totalorder %s46, %s48
      %p52 = scmp.eq.s32.totalorder %s12, 0
      %p53 = por %p51, %p52
      %p54 = scmp.ne.s32.totalorder %s46, %s48
      %p55 = scmp.eq.s32.totalorder %s17, 1
      %p56 = por %p54, %p55
      %p57 = scmp.ne.s32.totalorder %s48, %s49
      %p58 = scmp.eq.s32.totalorder %s17, 0
      %p59 = por %p57, %p58
      %p60 = scmp.ne.s32.totalorder %s48, %s49
      %p61 = scmp.eq.s32.totalorder %s18, 1
      %p62 = por %p60, %p61
      %p64 = scmp.ne.s32.totalorder %s49, %s63
      %p65 = scmp.eq.s32.totalorder %s18, 0
      %p66 = por %p64, %p65
      %s68 = sadd.s32 %s67, 1
      %p71 = scmp.eq.s32.totalorder %s12, 1
      %p72 = scmp.ne.s32.totalorder %s67, %s69
      %p73 = scmp.eq.s32.totalorder %s12, 0
      %p74 = por %p72, %p73
      %p75 = scmp.ne.s32.totalorder %s67, %s69
      %p76 = scmp.eq.s32.totalorder %s17, 1
      %p77 = por %p75, %p76
      %p78 = scmp.ne.s32.totalorder %s69, %s70
      %p79 = scmp.eq.s32.totalorder %s17, 0
      %p80 = por %p78, %p79
      %p81 = scmp.ne.s32.totalorder %s69, %s70
      %p82 = scmp.eq.s32.totalorder %s18, 1
      %p83 = por %p81, %p82
      %p85 = scmp.ne.s32.totalorder %s70, %s84
      %p86 = scmp.eq.s32.totalorder %s18, 0
      %p87 = por %p85, %p86
      %s88 = ssub.s32 %s12, %s19
      %p89 = scmp.eq.s32.totalorder %s88, 0
      %s91 = sadd.s32 %s90, 1
      %s92 = scalar_select %p89, %s90, %s91
      %p95 = pneg %p89
      %p96 = scmp.eq.s32.totalorder %s12, 1
      %p97 = por %p95, %p96
      %p98 = scmp.ne.s32.totalorder %s90, %s93
      %p99 = scmp.eq.s32.totalorder %s12, 0
      %p100 = por %p98, %p99
      %p101 = scmp.ne.s32.totalorder %s90, %s93
      %p102 = scmp.eq.s32.totalorder %s17, 1
      %p103 = por %p101, %p102
      %p104 = scmp.ne.s32.totalorder %s93, %s94
      %p105 = scmp.eq.s32.totalorder %s17, 0
      %p106 = por %p104, %p105
      %p107 = scmp.ne.s32.totalorder %s93, %s94
      %p108 = scmp.eq.s32.totalorder %s18, 1
      %p109 = por %p107, %p108
      %p111 = scmp.ne.s32.totalorder %s94, %s110
      %p112 = scmp.eq.s32.totalorder %s18, 0
      %p113 = por %p111, %p112
      %p114 = scmp.le.s32.totalorder 1, %s12
      %p115 = scmp.lt.s32.totalorder %s12, 3
      %p116 = pnand %p114, %p115
      %p117 = pneg %p116
      // Predicated region
      $region9: #{tpu_custom_call.1} parent=5 // pred_check
        _
      $region10: #{tpu_custom_call.1} parent=5 // pred_check_branch
        %119 = sbr.rel (%p116) target = $region12
      $region11: #{tpu_custom_call.1} parent=5 // pred_region
        %s120 = ssub.s32 %s12, 1
        // Predicated region
        $region13: #{tpu_custom_call.1} parent=11 // pred_check
          %p121 = pneg %p59
        $region14: #{tpu_custom_call.1} parent=11 // pred_check_branch
          %123 = sbr.rel (%p121) target = $region16
        $region15: #{tpu_custom_call.1} parent=11 // pred_region
          _
        $region16: #{tpu_custom_call.1} parent=11 // pred_fallthru
          _
        // Predicated region
        $region17: #{tpu_custom_call.1} parent=11 // pred_check
          %p124 = pneg %p80
        $region18: #{tpu_custom_call.1} parent=11 // pred_check_branch
          %126 = sbr.rel (%p124) target = $region20
        $region19: #{tpu_custom_call.1} parent=11 // pred_region
          _
        $region20: #{tpu_custom_call.1} parent=11 // pred_fallthru
          _
      $region12: #{tpu_custom_call.1} parent=5 // pred_fallthru
        _
      %p127 = scmp.lt.s32.totalorder %s12, 2
      // Predicated region
      $region21: #{tpu_custom_call.1} parent=5 // pred_check
        %p128 = pneg %p127
      $region22: #{tpu_custom_call.1} parent=5 // pred_check_branch
        %130 = sbr.rel (%p128) target = $region24
      $region23: #{tpu_custom_call.1} parent=5 // pred_region
        // Predicated region
        $region25: #{tpu_custom_call.1} parent=23 // pred_check
          %p131 = pneg %p32
        $region26: #{tpu_custom_call.1} parent=23 // pred_check_branch
          %133 = sbr.rel (%p131) target = $region28
        $region27: #{tpu_custom_call.1} parent=23 // pred_region
          %s134 = smul.u32 2, %s12
          %p135 = scmp.lt.s32.totalorder %s134, 3
          %s136 = scalar_select %p135, %s134, 3
          %s137 = smul.addr %s136, 2
          %s138 = smul.addr %s137, 4
          %s139 = scalar_lea.vmem %s0, %s138
          %s140 = smul.u32 2, %s12
        $region28: #{tpu_custom_call.1} parent=23 // pred_fallthru
          _
      $region24: #{tpu_custom_call.1} parent=5 // pred_fallthru
        _
      %p141 = scmp.le.s32.totalorder 1, %s12
      %p142 = scmp.lt.s32.totalorder %s12, 3
      %p143 = pnand %p141, %p142
      %p144 = pneg %p143
      // Predicated region
      $region29: #{tpu_custom_call.1} parent=5 // pred_check
        _
      $region30: #{tpu_custom_call.1} parent=5 // pred_check_branch
        %146 = sbr.rel (%p143) target = $region32
      $region31: #{tpu_custom_call.1} parent=5 // pred_region
        %s147 = ssub.s32 %s12, 1
        %s148 = smul.u32 2, %s17
        %p149 = scmp.lt.s32.totalorder %s148, 3
        %s150 = scalar_select %p149, %s148, 3
        %s151 = smul.addr %s150, 2
        %s152 = smul.addr %s151, 4
        %s153 = scalar_lea.vmem %s0, %s152
        %p154 = pneg %p38
        %p155 = pneg %p35
        %p156 = pneg %p59
        %p157 = pneg %p56
        %p158 = pneg %p80
        %p159 = pneg %p77
        %p160 = pneg %p106
        %p161 = pneg %p103
        %s162 = sand.u32 %s93, 1
        %s163 = scalar_lea.sflag [#allocation3], %s162
        %s164 = sand.u32 %s93, 1
        %s165 = smul.addr %s164, 16
        %s166 = scalar_lea.vmem [#allocation2], %s165
        %s167 = smul.u32 2, %s17
        %p168 = scmp.lt.s32.totalorder %s167, 3
        %s169 = scalar_select %p168, %s167, 3
        %s170 = smul.addr %s169, 2
        %s171 = smul.addr %s170, 4
        %s172 = scalar_lea.vmem %s0, %s171
        %s173 = smul.u32 2, %s17
        %s174 = smul.u32 2, %s17
        %v176 = vld [vmem:[%s172] sm:$0xff]
        %v177 = vld [vmem:[%s172 + $0x8] sm:$0xff]
        %v178 = vld [vmem:[%s1] sm:$0xf]
        %v179 = vld [vmem:[%s1 + $0x4] sm:$0xf]
        %v180 = vld [vmem:[%s1 + $0x8] sm:$0xf]
        %v181 = vld [vmem:[%s1 + $0xc] sm:$0xf]
        %v182 = vld [vmem:[%s1 + $0x10] sm:$0xf]
        %v183 = vld [vmem:[%s1 + $0x14] sm:$0xf]
        %v184 = vld [vmem:[%s1 + $0x18] sm:$0xf]
        %v185 = vld [vmem:[%s1 + $0x1c] sm:$0xf]
        %v186 = vld [vmem:[%s1 + $0x20] sm:$0xf]
        %v187 = vld [vmem:[%s1 + $0x24] sm:$0xf]
        %v188 = vld [vmem:[%s1 + $0x28] sm:$0xf]
        %v189 = vld [vmem:[%s1 + $0x2c] sm:$0xf]
        %v190 = vld [vmem:[%s1 + $0x30] sm:$0xf]
        %v191 = vld [vmem:[%s1 + $0x34] sm:$0xf]
        %v192 = vld [vmem:[%s1 + $0x38] sm:$0xf]
        %v193 = vld [vmem:[%s1 + $0x3c] sm:$0xf]
        %v194 = vld [vmem:[%s1 + $0x40] sm:$0xf]
        %v195 = vld [vmem:[%s1 + $0x44] sm:$0xf]
        %v196 = vld [vmem:[%s1 + $0x48] sm:$0xf]
        %v197 = vld [vmem:[%s1 + $0x4c] sm:$0xf]
        %v198 = vld [vmem:[%s1 + $0x50] sm:$0xf]
        %v199 = vld [vmem:[%s1 + $0x54] sm:$0xf]
        %v200 = vld [vmem:[%s1 + $0x58] sm:$0xf]
        %v201 = vld [vmem:[%s1 + $0x5c] sm:$0xf]
        %v202 = vld [vmem:[%s1 + $0x60] sm:$0x3]
        %v203 = vld [vmem:[%s2] sm:$0x7]
        %v204 = vlaneseq
        %v205 = vshrl.u32 %v204, 7
        %v206 = vsub.s32 0, %v205
        %v207 = vrot.slane %v203, %v206
        %v210 = vunpack.c.l.b16 %v176
        %v211 = vunpack.c.h.b16 %v176
        %v212 = vunpack.c.l.b16 %v177
        %v213 = vunpack.c.h.b16 %v177
        %v214 = vpack.c.b16 %v212, %v210
        %v215 = vpack.c.b16 %v213, %v211
        %v242 = vunpack.c.l.b16 %v178
        %v243 = vunpack.c.l.b16 %v179
        %v244 = vunpack.c.l.b16 %v180
        %v245 = vunpack.c.l.b16 %v181
        %v246 = vunpack.c.l.b16 %v182
        %v247 = vunpack.c.l.b16 %v183
        %v248 = vunpack.c.l.b16 %v184
        %v249 = vunpack.c.l.b16 %v185
        %v250 = vunpack.c.l.b16 %v186
        %v251 = vunpack.c.l.b16 %v187
        %v252 = vunpack.c.l.b16 %v188
        %v253 = vunpack.c.l.b16 %v189
        %v254 = vunpack.c.l.b16 %v190
        %v255 = vunpack.c.l.b16 %v191
        %v256 = vunpack.c.l.b16 %v192
        %v257 = vunpack.c.l.b16 %v193
        %v258 = vunpack.c.l.b16 %v194
        %v259 = vunpack.c.l.b16 %v195
        %v260 = vunpack.c.l.b16 %v196
        %v261 = vunpack.c.l.b16 %v197
        %v262 = vunpack.c.l.b16 %v198
        %v263 = vunpack.c.l.b16 %v199
        %v264 = vunpack.c.l.b16 %v200
        %v265 = vunpack.c.l.b16 %v201
        %v266 = vunpack.c.l.b16 %v202
        %v267 = vpack.c.b16 %v243, %v242
        %v268 = vpack.c.b16 %v245, %v244
        %v269 = vpack.c.b16 %v247, %v246
        %v270 = vpack.c.b16 %v249, %v248
        %v271 = vpack.c.b16 %v251, %v250
        %v272 = vpack.c.b16 %v253, %v252
        %v273 = vpack.c.b16 %v255, %v254
        %v274 = vpack.c.b16 %v257, %v256
        %v275 = vpack.c.b16 %v259, %v258
        %v276 = vpack.c.b16 %v261, %v260
        %v277 = vpack.c.b16 %v263, %v262
        %v278 = vpack.c.b16 %v265, %v264
        %v279 = vpack.c.b16 %v266, %v266
        %vm292 = vcmask 556032
        %v294 = vsel %vm292, %v215, 0
        %vm296 = vcmask 1041408
        %v298 = vsel %vm296, %v279, 0
        %300 = vmatprep.subr.bf16.mxu0 0
        %301 = vmatpush1.bf16.msra.mxu0 %v274
        %302 = vmatprep.subr.bf16.mxu0 0
        %303 = vmatpush1.bf16.msra.mxu0 %v273
        %304 = vmatprep.subr.bf16.mxu0 0
        %305 = vmatpush1.bf16.msra.mxu0 %v272
        %306 = vmatprep.subr.bf16.mxu0 0
        %307 = vmatpush1.bf16.msra.mxu0 %v271
        %308 = vmatprep.subr.bf16.mxu0 0
        %309 = vmatpush1.bf16.msra.mxu0 %v270
        %310 = vmatprep.subr.bf16.mxu0 0
        %311 = vmatpush1.bf16.msra.mxu0 %v269
        %312 = vmatprep.subr.bf16.mxu0 0
        %313 = vmatpush1.bf16.msra.mxu0 %v268
        %314 = vmatprep.subr.bf16.mxu0 0
        %315 = vmatpush1.bf16.msra.mxu0 %v267
        %316 = vmatprep.subr.bf16.mxu0 0
        %317 = vmatpush2.bf16.msra.mxu0 0
        %318 = vmatprep.subr.bf16.mxu0 0
        %319 = vmatpush2.bf16.msra.mxu0 0
        %320 = vmatprep.subr.bf16.mxu0 0
        %321 = vmatpush2.bf16.msra.mxu0 0
        %322 = vmatprep.subr.bf16.mxu0 0
        %323 = vmatpush2.bf16.msra.mxu0 %v298
        %324 = vmatprep.subr.bf16.mxu0 0
        %325 = vmatpush2.bf16.msra.mxu0 %v278
        %326 = vmatprep.subr.bf16.mxu0 0
        %327 = vmatpush2.bf16.msra.mxu0 %v277
        %328 = vmatprep.subr.bf16.mxu0 0
        %329 = vmatpush2.bf16.msra.mxu0 %v276
        %330 = vmatprep.subr.bf16.mxu0 0
        %331 = vmatpush2.bf16.msra.mxu0 %v275
        %332 = vmatprep.mubr.bf16.mxu0 %v294
        %333 = vmatmul.mubr.bf16.gmra.mxu0 %v214
        %v334 = vpop.f32.mrf.mxu0
        %v335 = vadd.f32 %v207, %v334
        %v336 = vpop.f32.mrf.mxu0
        %v337 = vpop.f32.mrf.mxu0
        %v338 = vadd.f32 %v207, %v337
        %v339 = vpop.f32.mrf.mxu0
        %340 = vdwg.mxu0
        %vm341 = vcmask 261120
        %v342 = vsel %vm341, %v335, 0.0
        %343 = vadd.xlane.f32.xlu0 %v342
        %v344 = vpop.xlane.xlu0 %343
        %v345 = vsel %vm341, %v338, 0.0
        %346 = vadd.xlane.f32.xlu0 %v345
        %v347 = vpop.xlane.xlu0 %346
        %v348 = vrcp.pop 32.0
        %v349 = vmul.f32 %v344, %v348
        %v350 = vmul.f32 %v347, %v348
        %v351 = vsub.f32 %v335, %v349
        %v352 = vsub.f32 %v338, %v350
        %v353 = vmul.f32 %v351, %v351
        %v354 = vmul.f32 %v352, %v352
        %v355 = vsel %vm341, %v353, 0.0
        %356 = vadd.xlane.f32.xlu0 %v355
        %v357 = vpop.xlane.xlu0 %356
        %v358 = vsel %vm341, %v354, 0.0
        %359 = vadd.xlane.f32.xlu0 %v358
        %v360 = vpop.xlane.xlu0 %359
        %v361 = vmul.f32 %v357, %v348
        %v362 = vmul.f32 %v360, %v348
        %v363 = vadd.f32 %v361, 1e-05
        %v364 = vadd.f32 %v362, 1e-05
        %v365 = vrsqrt.pop %v363
        %v366 = vrsqrt.pop %v364
        %v367 = vmul.f32 %v351, %v365
        %v368 = vmul.f32 %v352, %v366
        %v369 = vlaneseq
        %v370 = vshrl.u32 %v369, 7
        %v371 = vsub.s32 1, %v370
        %v372 = vrot.slane %v203, %v371
        %v373 = vmul.f32 %v367, %v372
        %v374 = vmul.f32 %v368, %v372
        %v375 = vlaneseq
        %v376 = vshrl.u32 %v375, 7
        %v377 = vsub.s32 2, %v376
        %v378 = vrot.slane %v203, %v377
        %v379 = vadd.f32 %v373, %v378
        %v380 = vadd.f32 %v374, %v378
        %381 = vst.msk [vmem:[%s166] sm:$0xff] %vm341, %v379
        %382 = vst.msk [vmem:[%s166 + $0x8] sm:$0xff] %vm341, %v380
        %s383 = sand.u32 %s93, 1
        %s384 = scalar_lea.sflag [#allocation3], %s383
        %s385 = sand.u32 %s93, 1
        %s386 = smul.addr %s385, 16
        %s387 = scalar_lea.vmem [#allocation2], %s386
        // Predicated region
        $region33: #{tpu_custom_call.1} parent=31 // pred_check
          %p388 = pneg %p103
        $region34: #{tpu_custom_call.1} parent=31 // pred_check_branch
          %390 = sbr.rel (%p388) target = $region36
        $region35: #{tpu_custom_call.1} parent=31 // pred_region
          %s391 = smul.u32 2, %s17
          %s393 = ssub.s32 256, 256
          %394 = vsyncadd %s384, %s393
          %s395 = smul.addr %s391, 128
          %s396 = scalar_lea.hbm %s3, %s395
          %s397 = sshll.u32 %s387, 4
          %s398 = int_to_ptr.vmem [resolvable:$true] %s397
          %403 = dma.vmem_to_hbm [thread:$0]  %s398, 256, %s396, %s384, 128, 128, 8
        $region36: #{tpu_custom_call.1} parent=31 // pred_fallthru
          _
      $region32: #{tpu_custom_call.1} parent=5 // pred_fallthru
        _
      %p404 = scmp.le.s32.totalorder 2, %s12
      // Predicated region
      $region37: #{tpu_custom_call.1} parent=5 // pred_check
        %p405 = pneg %p404
      $region38: #{tpu_custom_call.1} parent=5 // pred_check_branch
        %407 = sbr.rel (%p405) target = $region40
      $region39: #{tpu_custom_call.1} parent=5 // pred_region
        %s408 = ssub.s32 %s12, 2
        // Predicated region
        $region41: #{tpu_custom_call.1} parent=39 // pred_check
          %p409 = pneg %p109
        $region42: #{tpu_custom_call.1} parent=39 // pred_check_branch
          %411 = sbr.rel (%p409) target = $region44
        $region43: #{tpu_custom_call.1} parent=39 // pred_region
          %s412 = sand.u32 %s94, 1
          %s413 = scalar_lea.sflag [#allocation3], %s412
          %s414 = sand.u32 %s94, 1
          %s415 = smul.addr %s414, 16
          %s416 = scalar_lea.vmem [#allocation2], %s415
          %417 = dma.done %s413, 256
        $region44: #{tpu_custom_call.1} parent=39 // pred_fallthru
          _
      $region40: #{tpu_custom_call.1} parent=5 // pred_fallthru
        _
    $region6: #{tpu_custom_call.1} parent=1 // loop_footer
      %s16 = sadd.s32 1, %s12
    $region7: #{tpu_custom_call.1} parent=1 // loop_footer_branch
      %11 = sbr.rel target = $region3
    $region8: #{tpu_custom_call.1} parent=1 // loop_exit
      _
    %418 = vsyncpa [#allocation3], 1
    %s419 = scalar_lea.sflag [#allocation3], 1
    %420 = vsyncpa %s419, 1

</llo_original>
